<compile_context>
chip_gen: v7x
topology: tpu7x:2x2x1
jax: 0.10.0
libtpu: 0.0.40
codegen_flags: <defaults>
</compile_context>

<pallas_src>
import functools

import jax
import jax.numpy as jnp
from jax.experimental import pallas as pl
from jax.experimental.pallas import tpu as pltpu


def _round_up(a, b):
    return -(-a // b) * b


def _layer1_kernel(x_ref, w_ref, o_ref, *, K, D, T1):
    """x_ref: (T+2*pad, bm) f32 VMEM; w_ref: (D, K) f32 SMEM; o_ref: (D*T1, bm) f32 VMEM."""
    # Sublane-strided "tap" slabs, shared by every output channel:
    #   taps[r][p, :] == x_padded[p*K + r, :]   for r in [0, 2K-2], p in [0, T1)
    # Everything downstream operates on full-width (T1, bm) slabs.
    taps = [x_ref[pl.ds(r, T1, stride=K), :] for r in range(2 * K - 1)]

    @pl.loop(0, D)                       # bounds per-channel live ranges at large bm
    def _(j):
        # Fused conv1d + max_pool1d(K):  pooled[p] = max_q sum_k w[j,k] * x[p*K + q + k]
        z = None
        for q in range(K):
            acc = taps[q] * w_ref[j, 0]
            for k in range(1, K):
                acc = acc + taps[q + k] * w_ref[j, k]
            z = acc if q == 0 else jnp.maximum(z, acc)
        z = jnp.maximum(z, 0.0)          # ReLU commutes with the window max

        # softmax over pooled time (sublane axis): XLU reductions + EUP reciprocal.
        m = jnp.max(z, axis=0, keepdims=True)
        e = jnp.exp(z - m)
        s = jnp.sum(e, axis=0, keepdims=True)
        inv = pl.reciprocal(s, approx=True)
        inv = inv * (2.0 - s * inv)      # Newton step 1
        inv = inv * (2.0 - s * inv)      # Newton step 2 (restores full f32 accuracy)

        row = pl.multiple_of(j * T1, T1)
        o_ref[pl.ds(row, T1), :] = e * inv


def layer1_forward(x, conv_kernel, kernel_size, *, block_m=2048, output_layout="torch"):
    """x: (B, T, N, d) f32; conv_kernel: (D, 1, K) f32.

    output_layout="torch"  -> (B, T1, N, d, D)  (matches the nn.Module; pays one permute)
    output_layout="kernel" -> (D, T1, B, N, d)  (canonical lane-dense layout; no permute)
    """
    B, T, N, d = x.shape
    D, one, K = conv_kernel.shape
    assert one == 1 and K == kernel_size
    pad = K // 2
    T_out = T + 2 * pad - K + 1
    T1 = T_out // K                      # matches torch max_pool1d (ceil_mode=False): tail dropped
    assert T1 >= 1, "sequence too short for the pooling window"
    M = B * N * d

    # Glue: time on sublanes, flattened (B,N,d) rows on lanes; one pass pads both the
    # conv halo and the ragged-M tail.
    # TODO(synk): read x[b] slabs directly in-kernel when N*d is a multiple of 128 to
    # drop this input relayout pass.
    xt = jnp.transpose(x, (1, 0, 2, 3)).reshape(T, M).astype(jnp.float32)

    Mp0 = _round_up(M, 128)
    # Big lane tiles amortize the ~0.35us/step fixed cost; cap the tile so the grid
    # keeps >=4 steps when M allows (keeps both v7x TensorCores busy).
    cap = max(128, _round_up(pl.cdiv(Mp0, 4), 128))
    bm = min(_round_up(block_m, 128), cap)
    Mp = _round_up(M, bm)
    if pad > 0 or Mp != M:
        xt = jnp.pad(xt, ((pad, pad), (0, Mp - M)))   # (T+2*pad, Mp)
    W = conv_kernel[:, 0, :].astype(jnp.float32)      # (D, K) scalars -> SMEM

    kern = functools.partial(_layer1_kernel, K=K, D=D, T1=T1)
    out = pl.pallas_call(
        kern,
        # Flattened (D*T1, Mp): full (8,128) tiles, unmasked lane-dense stores.
        out_shape=jax.ShapeDtypeStruct((D * T1, Mp), jnp.float32),
        grid_spec=pltpu.PrefetchScalarGridSpec(
            num_scalar_prefetch=0,
            grid=(Mp // bm,),
            in_specs=[
                pl.BlockSpec((T + 2 * pad, bm), lambda i: (0, i)),
                pl.BlockSpec(memory_space=pltpu.MemorySpace.SMEM),
            ],
            out_specs=pl.BlockSpec((D * T1, bm), lambda i: (0, i)),
        ),
        compiler_params=pltpu.CompilerParams(
            dimension_semantics=("parallel",),
            vmem_limit_bytes=32 * 1024 * 1024,        # raises v5e's 16 MiB default
        ),
    )(xt, W)

    out = out[:, :M].reshape(D, T1, B, N, d)          # canonical kernel layout
    if output_layout == "kernel":
        return out
    # PyTorch layout; this permute is the dominant glue cost for large M — prefer
    # output_layout="kernel" when the consumer can accept it.
    return jnp.transpose(out, (2, 1, 3, 4, 0))


def layer1_reference(x, conv_kernel, kernel_size):
    """Pure-JAX reference matching the torch semantics, for verification."""
    B, T, N, d = x.shape
    D, _, K = conv_kernel.shape
    pad = K // 2
    T_out = T + 2 * pad - K + 1
    T1 = T_out // K
    M = B * N * d
    xr = jnp.transpose(x, (0, 2, 3, 1)).reshape(M, T)
    xpad = jnp.pad(xr, ((0, 0), (pad, pad)))
    y = jnp.stack(
        [sum(conv_kernel[j, 0, k] * xpad[:, k:k + T_out] for k in range(K))
         for j in range(D)], axis=1)                        # (M, D, T_out)
    z = jnp.maximum(y, 0.0)
    z = z[:, :, :T1 * K].reshape(M, D, T1, K).max(-1)       # (M, D, T1)
    z = z.reshape(B, N, d, D, T1).transpose(0, 4, 1, 2, 3)  # (B, T1, N, d, D)
    return jax.nn.softmax(z, axis=1)


if __name__ == "__main__":
    key = jax.random.PRNGKey(0)
    kx, kw = jax.random.split(key)
    B, T, N, d = 4, 12, 5, 16          # x: (B, T, N, d);  M = B*N*d = 320
    D, kernel_size = 8, 3              # Layer1(d=d, D=D, joint_num=N, kernel_size=3)
    x = jax.random.normal(kx, (B, T, N, d), dtype=jnp.float32)
    # deterministic parameter init, mirroring torch.randn(D,1,K)*0.1
    conv_kernel = jax.random.normal(kw, (D, 1, kernel_size), dtype=jnp.float32) * 0.1

    # At this M the tile cap gives bm=128 -> 3 grid steps + ragged-M padding exercised.
    fwd = jax.jit(functools.partial(layer1_forward, kernel_size=kernel_size))
    out = jax.block_until_ready(fwd(x, conv_kernel))

    ref = layer1_reference(x, conv_kernel, kernel_size)
    T1 = (T + 2 * (kernel_size // 2) - kernel_size + 1) // kernel_size
    assert out.shape == ref.shape == (B, T1, N, d, D)
    assert jnp.allclose(out, ref, atol=1e-5, rtol=1e-5), "mismatch vs reference (torch layout)"

    # Canonical permute-free layout (review item #1): same numbers, no output transpose.
    fwd_k = jax.jit(functools.partial(layer1_forward, kernel_size=kernel_size,
                                      output_layout="kernel"))
    out_k = jax.block_until_ready(fwd_k(x, conv_kernel))
    assert jnp.allclose(jnp.transpose(out_k, (2, 1, 3, 4, 0)), ref, atol=1e-5, rtol=1e-5)

    print("KERNEL_OK")
</pallas_src>

<mosaic_0001>
module attributes {stable_mosaic.version = 11 : i64} {
  func.func @_layer1_kernel(%arg0: i32, %arg1: memref<14x128xf32, #tpu.memory_space<vmem>>, %arg2: memref<8x3xf32, #tpu.memory_space<smem>>, %arg3: memref<32x128xf32, #tpu.memory_space<vmem>>) attributes {dimension_semantics = [#tpu.dimension_semantics<parallel>], iteration_bounds = array<i64: 3>, scalar_prefetch = 0 : i64, scratch_operands = 0 : i64, tpu.core_type = #tpu.core_type<tc>, window_params = [{transform_indices = @transform_0, window_bounds = array<i64: 14, 128>}, {transform_indices = @transform_1, window_bounds = array<i64: 8, 3>}, {transform_indices = @transform_2, window_bounds = array<i64: 32, 128>}]} {
    %c0 = arith.constant 0 : index
    %c0_0 = arith.constant 0 : index
    %0 = tpu.strided_load %arg1[%c0, %c0_0] {strides = array<i32: 3, 1>} : memref<14x128xf32, #tpu.memory_space<vmem>>, vector<4x128xf32>
    %c1 = arith.constant 1 : index
    %c0_1 = arith.constant 0 : index
    %1 = tpu.strided_load %arg1[%c1, %c0_1] {strides = array<i32: 3, 1>} : memref<14x128xf32, #tpu.memory_space<vmem>>, vector<4x128xf32>
    %c2 = arith.constant 2 : index
    %c0_2 = arith.constant 0 : index
    %2 = tpu.strided_load %arg1[%c2, %c0_2] {strides = array<i32: 3, 1>} : memref<14x128xf32, #tpu.memory_space<vmem>>, vector<4x128xf32>
    %c3 = arith.constant 3 : index
    %c0_3 = arith.constant 0 : index
    %3 = tpu.strided_load %arg1[%c3, %c0_3] {strides = array<i32: 3, 1>} : memref<14x128xf32, #tpu.memory_space<vmem>>, vector<4x128xf32>
    %c4 = arith.constant 4 : index
    %c0_4 = arith.constant 0 : index
    %4 = tpu.strided_load %arg1[%c4, %c0_4] {strides = array<i32: 3, 1>} : memref<14x128xf32, #tpu.memory_space<vmem>>, vector<4x128xf32>
    %c0_i32 = arith.constant 0 : i32
    %c8_i32 = arith.constant 8 : i32
    %5 = arith.addi %c0_i32, %c8_i32 : i32
    %c1_i32 = arith.constant 1 : i32
    scf.for %arg4 = %c0_i32 to %5 step %c1_i32  : i32 {
      %c1_i32_6 = arith.constant 1 : i32
      %6 = arith.muli %arg4, %c1_i32_6 : i32
      %c0_i32_7 = arith.constant 0 : i32
      %7 = arith.addi %c0_i32_7, %6 : i32
      %8 = arith.index_cast %7 : i32 to index
      %c0_8 = arith.constant 0 : index
      %9 = memref.load %arg2[%8, %c0_8] : memref<8x3xf32, #tpu.memory_space<smem>>
      %10 = vector.broadcast %9 : f32 to vector<4x128xf32>
      %11 = arith.mulf %0, %10 : vector<4x128xf32>
      %12 = arith.index_cast %7 : i32 to index
      %c1_9 = arith.constant 1 : index
      %13 = memref.load %arg2[%12, %c1_9] : memref<8x3xf32, #tpu.memory_space<smem>>
      %14 = vector.broadcast %13 : f32 to vector<4x128xf32>
      %15 = arith.mulf %1, %14 : vector<4x128xf32>
      %16 = arith.addf %11, %15 : vector<4x128xf32>
      %17 = arith.index_cast %7 : i32 to index
      %c2_10 = arith.constant 2 : index
      %18 = memref.load %arg2[%17, %c2_10] : memref<8x3xf32, #tpu.memory_space<smem>>
      %19 = vector.broadcast %18 : f32 to vector<4x128xf32>
      %20 = arith.mulf %2, %19 : vector<4x128xf32>
      %21 = arith.addf %16, %20 : vector<4x128xf32>
      %22 = arith.index_cast %7 : i32 to index
      %c0_11 = arith.constant 0 : index
      %23 = memref.load %arg2[%22, %c0_11] : memref<8x3xf32, #tpu.memory_space<smem>>
      %24 = vector.broadcast %23 : f32 to vector<4x128xf32>
      %25 = arith.mulf %1, %24 : vector<4x128xf32>
      %26 = arith.index_cast %7 : i32 to index
      %c1_12 = arith.constant 1 : index
      %27 = memref.load %arg2[%26, %c1_12] : memref<8x3xf32, #tpu.memory_space<smem>>
      %28 = vector.broadcast %27 : f32 to vector<4x128xf32>
      %29 = arith.mulf %2, %28 : vector<4x128xf32>
      %30 = arith.addf %25, %29 : vector<4x128xf32>
      %31 = arith.index_cast %7 : i32 to index
      %c2_13 = arith.constant 2 : index
      %32 = memref.load %arg2[%31, %c2_13] : memref<8x3xf32, #tpu.memory_space<smem>>
      %33 = vector.broadcast %32 : f32 to vector<4x128xf32>
      %34 = arith.mulf %3, %33 : vector<4x128xf32>
      %35 = arith.addf %30, %34 : vector<4x128xf32>
      %36 = arith.maximumf %21, %35 : vector<4x128xf32>
      %37 = arith.index_cast %7 : i32 to index
      %c0_14 = arith.constant 0 : index
      %38 = memref.load %arg2[%37, %c0_14] : memref<8x3xf32, #tpu.memory_space<smem>>
      %39 = vector.broadcast %38 : f32 to vector<4x128xf32>
      %40 = arith.mulf %2, %39 : vector<4x128xf32>
      %41 = arith.index_cast %7 : i32 to index
      %c1_15 = arith.constant 1 : index
      %42 = memref.load %arg2[%41, %c1_15] : memref<8x3xf32, #tpu.memory_space<smem>>
      %43 = vector.broadcast %42 : f32 to vector<4x128xf32>
      %44 = arith.mulf %3, %43 : vector<4x128xf32>
      %45 = arith.addf %40, %44 : vector<4x128xf32>
      %46 = arith.index_cast %7 : i32 to index
      %c2_16 = arith.constant 2 : index
      %47 = memref.load %arg2[%46, %c2_16] : memref<8x3xf32, #tpu.memory_space<smem>>
      %48 = vector.broadcast %47 : f32 to vector<4x128xf32>
      %49 = arith.mulf %4, %48 : vector<4x128xf32>
      %50 = arith.addf %45, %49 : vector<4x128xf32>
      %51 = arith.maximumf %36, %50 : vector<4x128xf32>
      %cst = arith.constant 0.000000e+00 : f32
      %52 = vector.broadcast %cst : f32 to vector<4x128xf32>
      %53 = arith.maximumf %51, %52 : vector<4x128xf32>
      %cst_17 = arith.constant dense<0xFF800000> : vector<128xf32>
      %54 = vector.multi_reduction <maximumf>, %53, %cst_17 [0] : vector<4x128xf32> to vector<128xf32>
      %55 = vector.shape_cast %54 : vector<128xf32> to vector<1x128xf32>
      %56 = vector.broadcast %55 : vector<1x128xf32> to vector<4x128xf32>
      %57 = arith.subf %53, %56 : vector<4x128xf32>
      %58 = math.exp %57 : vector<4x128xf32>
      %cst_18 = arith.constant dense<0.000000e+00> : vector<128xf32>
      %59 = vector.multi_reduction <add>, %58, %cst_18 [0] : vector<4x128xf32> to vector<128xf32>
      %60 = vector.shape_cast %59 : vector<128xf32> to vector<1x128xf32>
      %61 = tpu.reciprocal %60 {approx = true} : vector<1x128xf32> -> vector<1x128xf32>
      %62 = arith.mulf %60, %61 : vector<1x128xf32>
      %cst_19 = arith.constant 2.000000e+00 : f32
      %63 = vector.broadcast %cst_19 : f32 to vector<1x128xf32>
      %64 = arith.subf %63, %62 : vector<1x128xf32>
      %65 = arith.mulf %61, %64 : vector<1x128xf32>
      %66 = arith.mulf %60, %65 : vector<1x128xf32>
      %cst_20 = arith.constant 2.000000e+00 : f32
      %67 = vector.broadcast %cst_20 : f32 to vector<1x128xf32>
      %68 = arith.subf %67, %66 : vector<1x128xf32>
      %69 = arith.mulf %65, %68 : vector<1x128xf32>
      %c4_i32 = arith.constant 4 : i32
      %70 = arith.muli %7, %c4_i32 : i32
      %71 = tpu.assume_multiple %70, 4 : i32
      %72 = vector.broadcast %69 : vector<1x128xf32> to vector<4x128xf32>
      %73 = arith.mulf %58, %72 : vector<4x128xf32>
      %74 = arith.index_cast %71 : i32 to index
      %c0_21 = arith.constant 0 : index
      %75 = vector.load %arg3[%74, %c0_21] : memref<32x128xf32, #tpu.memory_space<vmem>>, vector<4x128xf32>
      tpu.vector_store %arg3[%74, %c0_21], %73 {strides = array<i32>} : memref<32x128xf32, #tpu.memory_space<vmem>>, vector<4x128xf32>,
    }
    %c8_i32_5 = arith.constant 8 : i32
    return
  }
  func.func @transform_0(%arg0: i32) -> (i32, i32) {
    %c0_i32 = arith.constant 0 : i32
    %c0_i32_0 = arith.constant 0 : i32
    return %c0_i32, %arg0 : i32, i32
  }
  func.func @transform_1(%arg0: i32) -> (i32, i32) {
    %c0_i32 = arith.constant 0 : i32
    %c0_i32_0 = arith.constant 0 : i32
    %c0_i32_1 = arith.constant 0 : i32
    return %c0_i32, %c0_i32_0 : i32, i32
  }
  func.func @transform_2(%arg0: i32) -> (i32, i32) {
    %c0_i32 = arith.constant 0 : i32
    %c0_i32_0 = arith.constant 0 : i32
    return %c0_i32, %arg0 : i32, i32
  }
}

</mosaic_0001>

<llo_original>
// kernel: layer1_forward.1
$region0: #{layer1_forward.1}
  #allocation0 [shape = 'u32[]', space=smem, size = 0x4, offset = 0x4, fixed_abs, tag = 'smem constant byte address 0x4 - core index']
  #allocation1 [shape = 'u32[144,128]{1,0:T(1,128)}', space=vmem, size = 0x12000, scoped, tag = 'internal scratch']
  %s0 = inlined_call_operand.vmem [shape: f32[14,384], index: 0, kind: input, shape index: {}]
  %s1 = inlined_call_operand.vmem [shape: f32[8,3], index: 1, kind: input, shape index: {}]
  %s2 = inlined_call_operand.vmem [shape: f32[32,384], index: 2, kind: output, shape index: {}]
  %s3 = sld [smem:[#allocation0]]
  $region124: #{layer1_forward.1} parent=0
    _
  %s5 = ssub.s32 1, %s3
  %s6 = scalar_select 0, %s5, %s3
  $region1: #{layer1_forward.1} parent=0
    #allocation2 [shape = 'u8[16384]{0}', space=vmem, size = 0x4000, scoped, tag = 'input window, operand 0']
    #allocation3 [shape = 'u8[4096]{0}', space=smem, size = 0x1000, scoped, tag = 'input window, operand 1, single buffered']
    #allocation4 [shape = 's32[2]{0}', space=sflag, size = 0x8, scoped, tag = 'scoped memory for layer1_forward.1']
    #allocation5 [shape = 'u8[32768]{0}', space=vmem, size = 0x8000, scoped, tag = 'output window, operand 0']
    %7 = vsyncpa [#allocation4], 0
    loop: start=0, step=1, limit=5
    $region2: #{layer1_forward.1} parent=1 // loop_pre_header
      _
    $region3: #{layer1_forward.1} parent=1 // loop_header
      %s9 = sphi 0, %s13
      %p10 = scmp.ge.s32.totalorder %s9, 5
      %s19 = sphi 0, %s21
      %s22 = sphi 0, %s19
      %s23 = sphi 0, %s22
      %s39 = sphi 0, %s23
      %s43 = sphi 0, %s43
      %s45 = sphi 0, %s43
      %s46 = sphi 0, %s45
      %s60 = sphi 0, %s46
      %s66 = sphi 0, %s68
      %s69 = sphi 0, %s66
      %s70 = sphi 0, %s69
      %s86 = sphi 0, %s70
    $region4: #{layer1_forward.1} parent=1 // loop_header_branch
      %12 = sbr.rel (%p10) target = $region8
    $region5: #{layer1_forward.1} parent=1 // loop_body
      %s14 = ssub.s32 %s9, 1
      %s15 = ssub.s32 %s9, 2
      %s16 = sadd.s32 %s9, 1
      %s17 = ssub.s32 %s9, %s16
      %p18 = scmp.eq.s32.totalorder %s17, 0
      %s20 = sadd.s32 %s19, 1
      %s21 = scalar_select %p18, %s19, %s20
      %p24 = pneg %p18
      %p25 = scmp.eq.s32.totalorder %s9, 2
      %p26 = por %p24, %p25
      %p27 = scmp.ne.s32.totalorder %s19, %s22
      %p28 = scmp.eq.s32.totalorder %s9, 0
      %p29 = por %p27, %p28
      %p30 = scmp.ne.s32.totalorder %s19, %s22
      %p31 = scmp.eq.s32.totalorder %s14, 2
      %p32 = por %p30, %p31
      %p33 = scmp.ne.s32.totalorder %s22, %s23
      %p34 = scmp.eq.s32.totalorder %s14, 0
      %p35 = por %p33, %p34
      %p36 = scmp.ne.s32.totalorder %s22, %s23
      %p37 = scmp.eq.s32.totalorder %s15, 2
      %p38 = por %p36, %p37
      %p40 = scmp.ne.s32.totalorder %s23, %s39
      %p41 = scmp.eq.s32.totalorder %s15, 0
      %p42 = por %p40, %p41
      %s44 = sadd.s32 %s43, 1
      %p47 = scmp.eq.s32.totalorder %s9, 2
      %p48 = scmp.ne.s32.totalorder %s43, %s45
      %p49 = scmp.eq.s32.totalorder %s9, 0
      %p50 = por %p48, %p49
      %p51 = scmp.ne.s32.totalorder %s43, %s45
      %p52 = scmp.eq.s32.totalorder %s14, 2
      %p53 = por %p51, %p52
      %p54 = scmp.ne.s32.totalorder %s45, %s46
      %p55 = scmp.eq.s32.totalorder %s14, 0
      %p56 = por %p54, %p55
      %p57 = scmp.ne.s32.totalorder %s45, %s46
      %p58 = scmp.eq.s32.totalorder %s15, 2
      %p59 = por %p57, %p58
      %p61 = scmp.ne.s32.totalorder %s46, %s60
      %p62 = scmp.eq.s32.totalorder %s15, 0
      %p63 = por %p61, %p62
      %s64 = ssub.s32 %s9, %s16
      %p65 = scmp.eq.s32.totalorder %s64, 0
      %s67 = sadd.s32 %s66, 1
      %s68 = scalar_select %p65, %s66, %s67
      %p71 = pneg %p65
      %p72 = scmp.eq.s32.totalorder %s9, 2
      %p73 = por %p71, %p72
      %p74 = scmp.ne.s32.totalorder %s66, %s69
      %p75 = scmp.eq.s32.totalorder %s9, 0
      %p76 = por %p74, %p75
      %p77 = scmp.ne.s32.totalorder %s66, %s69
      %p78 = scmp.eq.s32.totalorder %s14, 2
      %p79 = por %p77, %p78
      %p80 = scmp.ne.s32.totalorder %s69, %s70
      %p81 = scmp.eq.s32.totalorder %s14, 0
      %p82 = por %p80, %p81
      %p83 = scmp.ne.s32.totalorder %s69, %s70
      %p84 = scmp.eq.s32.totalorder %s15, 2
      %p85 = por %p83, %p84
      %p87 = scmp.ne.s32.totalorder %s70, %s86
      %p88 = scmp.eq.s32.totalorder %s15, 0
      %p89 = por %p87, %p88
      %p90 = scmp.le.s32.totalorder 1, %s9
      %p91 = scmp.lt.s32.totalorder %s9, 4
      %p92 = pnand %p90, %p91
      %p93 = pneg %p92
      // Predicated region
      $region9: #{layer1_forward.1} parent=5 // pred_check
        _
      $region10: #{layer1_forward.1} parent=5 // pred_check_branch
        %95 = sbr.rel (%p92) target = $region12
      $region11: #{layer1_forward.1} parent=5 // pred_region
        %s96 = ssub.s32 %s9, 1
        // Predicated region
        $region13: #{layer1_forward.1} parent=11 // pred_check
          %p97 = pneg %p56
        $region14: #{layer1_forward.1} parent=11 // pred_check_branch
          %99 = sbr.rel (%p97) target = $region16
        $region15: #{layer1_forward.1} parent=11 // pred_region
          %s101 = ssub.s32 128, 128
          %102 = vsyncadd [#allocation4], %s101
          %s104 = sshll.u32 %s1, 4
          %s105 = int_to_ptr.vmem [resolvable:$true] %s104
          %107 = dma.vmem_to_smem %s105, 128, [#allocation3], [#allocation4]
        $region16: #{layer1_forward.1} parent=11 // pred_fallthru
          _
      $region12: #{layer1_forward.1} parent=5 // pred_fallthru
        _
      %p108 = scmp.lt.s32.totalorder %s9, 3
      // Predicated region
      $region17: #{layer1_forward.1} parent=5 // pred_check
        %p109 = pneg %p108
      $region18: #{layer1_forward.1} parent=5 // pred_check_branch
        %111 = sbr.rel (%p109) target = $region20
      $region19: #{layer1_forward.1} parent=5 // pred_region
        // Predicated region
        $region21: #{layer1_forward.1} parent=19 // pred_check
          %p112 = pneg %p29
        $region22: #{layer1_forward.1} parent=19 // pred_check_branch
          %114 = sbr.rel (%p112) target = $region24
        $region23: #{layer1_forward.1} parent=19 // pred_region
          %s115 = sand.u32 %s19, 1
          %s116 = sand.u32 %s19, 1
          %s117 = smul.addr %s116, 16
          %s118 = scalar_lea.vmem [#allocation2], %s117
          %s119 = smul.addr %s9, 8
          %s120 = scalar_lea.vmem %s0, %s119
          // Predicated region
          $region25: #{layer1_forward.1} parent=23 // pred_check
            _
          $region26: #{layer1_forward.1} parent=23 // pred_check_branch
            %122 = sbr.rel (0) target = $region28
          $region27: #{layer1_forward.1} parent=23 // pred_region
            // Predicated region
            $region29: #{layer1_forward.1} parent=27 // pred_check
              _
            $region30: #{layer1_forward.1} parent=27 // pred_check_branch
              %124 = sbr.rel (0) target = $region32
            $region31: #{layer1_forward.1} parent=27 // pred_region
              // Predicated region
              $region44: #{layer1_forward.1} parent=31 // pred_check
                _
              $region45: #{layer1_forward.1} parent=31 // pred_check_branch
                %141 = sbr.rel (0) target = $region47
              $region46: #{layer1_forward.1} parent=31 // pred_region
                loop: start=0, step=1, limit=1
                $region48: #{layer1_forward.1} parent=46 // loop_pre_header
                  _
                $region49: #{layer1_forward.1} parent=46 // loop_header
                  %s143 = sphi 0, %s147
                  %p144 = scmp.ge.s32.totalorder %s143, 1
                  %s148 = sphi %s120, %s120
                  %s149 = sphi %s118, %s118
                $region50: #{layer1_forward.1} parent=46 // loop_header_branch
                  %146 = sbr.rel (%p144) target = $region54
                $region51: #{layer1_forward.1} parent=46 // loop_body
                  %v150 = vld [vmem:[%s148] sm:$0xff]
                  %151 = vst [vmem:[%s149] sm:$0xff] %v150
                  %v152 = vld [vmem:[%s148 + $0x18] sm:$0xff]
                  %153 = vst [vmem:[%s149 + $0x8] sm:$0xff] %v152
                $region52: #{layer1_forward.1} parent=46 // loop_footer
                  %s147 = sadd.s32 1, %s143
                $region53: #{layer1_forward.1} parent=46 // loop_footer_branch
                  %142 = sbr.rel target = $region49
                $region54: #{layer1_forward.1} parent=46 // loop_exit
                  _
              $region47: #{layer1_forward.1} parent=31 // pred_fallthru
                _
              // Predicated region
              $region55: #{layer1_forward.1} parent=31 // pred_check
                _
              $region56: #{layer1_forward.1} parent=31 // pred_check_branch
                %155 = sbr.rel target = $region58
              $region57: #{layer1_forward.1} parent=31 // pred_region
                _
              $region58: #{layer1_forward.1} parent=31 // pred_fallthru
                _
            $region32: #{layer1_forward.1} parent=27 // pred_fallthru
              _
            // Predicated region
            $region33: #{layer1_forward.1} parent=27 // pred_check
              _
            $region34: #{layer1_forward.1} parent=27 // pred_check_branch
              %126 = sbr.rel target = $region36
            $region35: #{layer1_forward.1} parent=27 // pred_region
              loop: start=0, step=1, limit=1
              $region37: #{layer1_forward.1} parent=35 // loop_pre_header
                _
              $region38: #{layer1_forward.1} parent=35 // loop_header
                %s129 = sphi 0, %s133
                %p130 = scmp.ge.s32.totalorder %s129, 1
                %s134 = sphi %s120, %s120
                %s135 = sphi %s118, %s118
              $region39: #{layer1_forward.1} parent=35 // loop_header_branch
                %132 = sbr.rel (%p130) target = $region43
              $region40: #{layer1_forward.1} parent=35 // loop_body
                %v136 = vld [vmem:[%s134] sm:$0xff]
                %137 = vst [vmem:[%s135] sm:$0xff] %v136
                %v138 = vld [vmem:[%s134 + $0x18] sm:$0xff]
                %139 = vst [vmem:[%s135 + $0x8] sm:$0xff] %v138
              $region41: #{layer1_forward.1} parent=35 // loop_footer
                %s133 = sadd.s32 1, %s129
              $region42: #{layer1_forward.1} parent=35 // loop_footer_branch
                %128 = sbr.rel target = $region38
              $region43: #{layer1_forward.1} parent=35 // loop_exit
                _
            $region36: #{layer1_forward.1} parent=27 // pred_fallthru
              _
          $region28: #{layer1_forward.1} parent=23 // pred_fallthru
            _
          %156 = vnop
        $region24: #{layer1_forward.1} parent=19 // pred_fallthru
          _
      $region20: #{layer1_forward.1} parent=5 // pred_fallthru
        _
      %p157 = scmp.le.s32.totalorder 1, %s9
      %p158 = scmp.lt.s32.totalorder %s9, 4
      %p159 = pnand %p157, %p158
      %p160 = pneg %p159
      // Predicated region
      $region59: #{layer1_forward.1} parent=5 // pred_check
        _
      $region60: #{layer1_forward.1} parent=5 // pred_check_branch
        %162 = sbr.rel (%p159) target = $region62
      $region61: #{layer1_forward.1} parent=5 // pred_region
        %s163 = ssub.s32 %s9, 1
        %s164 = sand.u32 %s22, 1
        %s165 = sand.u32 %s22, 1
        %s166 = smul.addr %s165, 16
        %s167 = scalar_lea.vmem [#allocation2], %s166
        // Predicated region
        $region63: #{layer1_forward.1} parent=61 // pred_check
          %p168 = pneg %p35
        $region64: #{layer1_forward.1} parent=61 // pred_check_branch
          %170 = sbr.rel (%p168) target = $region66
        $region65: #{layer1_forward.1} parent=61 // pred_region
          _
        $region66: #{layer1_forward.1} parent=61 // pred_fallthru
          _
        // Predicated region
        $region67: #{layer1_forward.1} parent=61 // pred_check
          %p171 = pneg %p56
        $region68: #{layer1_forward.1} parent=61 // pred_check_branch
          %173 = sbr.rel (%p171) target = $region70
        $region69: #{layer1_forward.1} parent=61 // pred_region
          %174 = dma.done [#allocation4], 128
        $region70: #{layer1_forward.1} parent=61 // pred_fallthru
          _
        %175 = sfence
        %s176 = sand.u32 %s22, 1
        %s177 = sand.u32 %s22, 1
        %s178 = smul.addr %s177, 16
        %s179 = scalar_lea.vmem [#allocation2], %s178
        %p180 = pneg %p35
        %p181 = pneg %p32
        %p182 = pneg %p56
        %p183 = pneg %p53
        %p184 = pneg %p82
        %p185 = pneg %p79
        %s186 = sand.u32 %s69, 1
        %s187 = sand.u32 %s69, 1
        %s188 = smul.addr %s187, 32
        %s189 = scalar_lea.vmem [#allocation5], %s188
        %v190 = vld [vmem:[%s167] ss:$3 sm:$0xf]
        %s191 = scalar_lea.vmem %s167, 1 [#allocation2]
        %v192 = vld [vmem:[%s191] ss:$3 sm:$0xf]
        %s193 = scalar_lea.vmem %s167, 2 [#allocation2]
        %v194 = vld [vmem:[%s193] ss:$3 sm:$0xf]
        %s195 = scalar_lea.vmem %s167, 3 [#allocation2]
        %v196 = vld [vmem:[%s195] ss:$3 sm:$0xf]
        %s197 = scalar_lea.vmem %s167, 4 [#allocation2]
        %v198 = vld [vmem:[%s197] ss:$3 sm:$0xf]
        loop: start=0, step=1, limit=8
        $region71: #{layer1_forward.1} parent=61 // loop_pre_header
          _
        $region72: #{layer1_forward.1} parent=61 // loop_header
          %s200 = sphi 0, %s204
          %p201 = scmp.ge.s32.totalorder %s200, 8
        $region73: #{layer1_forward.1} parent=61 // loop_header_branch
          %203 = sbr.rel (%p201) target = $region77
        $region74: #{layer1_forward.1} parent=61 // loop_body
          %s205 = smul.u32 %s200, 128
          %s206 = sld [smem:[#allocation3 + %s205]]
          %v207 = vstv %s206
          %v208 = vmul.f32 %v190, %v207
          %s209 = sadd.s32 %s205, 1
          %s210 = sld [smem:[#allocation3 + %s209]]
          %v211 = vstv %s210
          %v212 = vmul.f32 %v192, %v211
          %v213 = vadd.f32 %v208, %v212
          %s214 = sadd.s32 %s205, 2
          %s215 = sld [smem:[#allocation3 + %s214]]
          %v216 = vstv %s215
          %v217 = vmul.f32 %v194, %v216
          %v218 = vadd.f32 %v213, %v217
          %v219 = vmul.f32 %v192, %v207
          %v220 = vmul.f32 %v194, %v211
          %v221 = vadd.f32 %v219, %v220
          %v222 = vmul.f32 %v196, %v216
          %v223 = vadd.f32 %v221, %v222
          %v224 = vmax.f32 %v218, %v223
          %v225 = vmul.f32 %v194, %v207
          %v226 = vmul.f32 %v196, %v211
          %v227 = vadd.f32 %v225, %v226
          %v228 = vmul.f32 %v198, %v216
          %v229 = vadd.f32 %v227, %v228
          %v230 = vmax.f32 %v224, %v229
          %v231 = vmax.f32 %v230, 0.0
          %vm232 = vcmask 1043456
          %v233 = vsel %vm232, %v231, -inf
          %v234 = vrot.slane %v233, 4
          %v235 = vmax.f32 %v233, %v234
          %v236 = vrot.slane %v235, 2
          %v237 = vmax.f32 %v235, %v236
          %v238 = vrot.slane %v237, 1
          %v239 = vmax.f32 %v237, %v238
          %v240 = vsub.f32 %v231, %v239
          %v241 = vmul.f32 %v240, 1.442695
          %v242 = vpow.pop %v241
          %v243 = vsel %vm232, %v242, 0.0
          %v244 = vrot.slane %v243, 4
          %v245 = vadd.f32 %v243, %v244
          %v246 = vrot.slane %v245, 2
          %v247 = vadd.f32 %v245, %v246
          %v248 = vrot.slane %v247, 1
          %v249 = vadd.f32 %v247, %v248
          %v250 = vrcp.pop %v249
          %v251 = vmul.f32 %v249, %v250
          %v252 = vsub.f32 2.0, %v251
          %v253 = vmul.f32 %v250, %v252
          %v254 = vmul.f32 %v249, %v253
          %v255 = vsub.f32 2.0, %v254
          %v256 = vmul.f32 %v253, %v255
          %s257 = smul.u32 %s200, 4
          %v258 = vmul.f32 %v242, %v256
          %s259 = scalar_lea.vmem %s189, %s257 [#allocation5]
          %260 = vst [vmem:[%s259] sm:$0xf] %v258
        $region75: #{layer1_forward.1} parent=61 // loop_footer
          %s204 = sadd.s32 1, %s200
        $region76: #{layer1_forward.1} parent=61 // loop_footer_branch
          %199 = sbr.rel target = $region72
        $region77: #{layer1_forward.1} parent=61 // loop_exit
          _
        %s261 = sand.u32 %s69, 1
        %s262 = sand.u32 %s69, 1
        %s263 = smul.addr %s262, 32
        %s264 = scalar_lea.vmem [#allocation5], %s263
        // Predicated region
        $region78: #{layer1_forward.1} parent=61 // pred_check
          %p265 = pneg %p79
        $region79: #{layer1_forward.1} parent=61 // pred_check_branch
          %267 = sbr.rel (%p265) target = $region81
        $region80: #{layer1_forward.1} parent=61 // pred_region
          %s268 = smul.addr %s14, 8
          %s269 = scalar_lea.vmem %s2, %s268
          // Predicated region
          $region82: #{layer1_forward.1} parent=80 // pred_check
            _
          $region83: #{layer1_forward.1} parent=80 // pred_check_branch
            %271 = sbr.rel (0) target = $region85
          $region84: #{layer1_forward.1} parent=80 // pred_region
            // Predicated region
            $region86: #{layer1_forward.1} parent=84 // pred_check
              _
            $region87: #{layer1_forward.1} parent=84 // pred_check_branch
              %273 = sbr.rel (0) target = $region89
            $region88: #{layer1_forward.1} parent=84 // pred_region
              // Predicated region
              $region101: #{layer1_forward.1} parent=88 // pred_check
                _
              $region102: #{layer1_forward.1} parent=88 // pred_check_branch
                %294 = sbr.rel (0) target = $region104
              $region103: #{layer1_forward.1} parent=88 // pred_region
                loop: start=0, step=1, limit=1
                $region105: #{layer1_forward.1} parent=103 // loop_pre_header
                  _
                $region106: #{layer1_forward.1} parent=103 // loop_header
                  %s296 = sphi 0, %s300
                  %p297 = scmp.ge.s32.totalorder %s296, 1
                  %s301 = sphi %s264, %s264
                  %s302 = sphi %s269, %s269
                $region107: #{layer1_forward.1} parent=103 // loop_header_branch
                  %299 = sbr.rel (%p297) target = $region111
                $region108: #{layer1_forward.1} parent=103 // loop_body
                  %v303 = vld [vmem:[%s301] sm:$0xff]
                  %304 = vst [vmem:[%s302] sm:$0xff] %v303
                  %v305 = vld [vmem:[%s301 + $0x8] sm:$0xff]
                  %306 = vst [vmem:[%s302 + $0x18] sm:$0xff] %v305
                  %v307 = vld [vmem:[%s301 + $0x10] sm:$0xff]
                  %308 = vst [vmem:[%s302 + $0x30] sm:$0xff] %v307
                  %v309 = vld [vmem:[%s301 + $0x18] sm:$0xff]
                  %310 = vst [vmem:[%s302 + $0x48] sm:$0xff] %v309
                $region109: #{layer1_forward.1} parent=103 // loop_footer
                  %s300 = sadd.s32 1, %s296
                $region110: #{layer1_forward.1} parent=103 // loop_footer_branch
                  %295 = sbr.rel target = $region106
                $region111: #{layer1_forward.1} parent=103 // loop_exit
                  _
              $region104: #{layer1_forward.1} parent=88 // pred_fallthru
                _
              // Predicated region
              $region112: #{layer1_forward.1} parent=88 // pred_check
                _
              $region113: #{layer1_forward.1} parent=88 // pred_check_branch
                %312 = sbr.rel target = $region115
              $region114: #{layer1_forward.1} parent=88 // pred_region
                _
              $region115: #{layer1_forward.1} parent=88 // pred_fallthru
                _
            $region89: #{layer1_forward.1} parent=84 // pred_fallthru
              _
            // Predicated region
            $region90: #{layer1_forward.1} parent=84 // pred_check
              _
            $region91: #{layer1_forward.1} parent=84 // pred_check_branch
              %275 = sbr.rel target = $region93
            $region92: #{layer1_forward.1} parent=84 // pred_region
              loop: start=0, step=1, limit=1
              $region94: #{layer1_forward.1} parent=92 // loop_pre_header
                _
              $region95: #{layer1_forward.1} parent=92 // loop_header
                %s278 = sphi 0, %s282
                %p279 = scmp.ge.s32.totalorder %s278, 1
                %s283 = sphi %s264, %s264
                %s284 = sphi %s269, %s269
              $region96: #{layer1_forward.1} parent=92 // loop_header_branch
                %281 = sbr.rel (%p279) target = $region100
              $region97: #{layer1_forward.1} parent=92 // loop_body
                %v285 = vld [vmem:[%s283] sm:$0xff]
                %286 = vst [vmem:[%s284] sm:$0xff] %v285
                %v287 = vld [vmem:[%s283 + $0x8] sm:$0xff]
                %288 = vst [vmem:[%s284 + $0x18] sm:$0xff] %v287
                %v289 = vld [vmem:[%s283 + $0x10] sm:$0xff]
                %290 = vst [vmem:[%s284 + $0x30] sm:$0xff] %v289
                %v291 = vld [vmem:[%s283 + $0x18] sm:$0xff]
                %292 = vst [vmem:[%s284 + $0x48] sm:$0xff] %v291
              $region98: #{layer1_forward.1} parent=92 // loop_footer
                %s282 = sadd.s32 1, %s278
              $region99: #{layer1_forward.1} parent=92 // loop_footer_branch
                %277 = sbr.rel target = $region95
              $region100: #{layer1_forward.1} parent=92 // loop_exit
                _
            $region93: #{layer1_forward.1} parent=84 // pred_fallthru
              _
          $region85: #{layer1_forward.1} parent=80 // pred_fallthru
            _
          %313 = vnop
        $region81: #{layer1_forward.1} parent=61 // pred_fallthru
          _
      $region62: #{layer1_forward.1} parent=5 // pred_fallthru
        _
      %p314 = scmp.le.s32.totalorder 2, %s9
      // Predicated region
      $region116: #{layer1_forward.1} parent=5 // pred_check
        %p315 = pneg %p314
      $region117: #{layer1_forward.1} parent=5 // pred_check_branch
        %317 = sbr.rel (%p315) target = $region119
      $region118: #{layer1_forward.1} parent=5 // pred_region
        %s318 = ssub.s32 %s9, 2
        // Predicated region
        $region120: #{layer1_forward.1} parent=118 // pred_check
          %p319 = pneg %p85
        $region121: #{layer1_forward.1} parent=118 // pred_check_branch
          %321 = sbr.rel (%p319) target = $region123
        $region122: #{layer1_forward.1} parent=118 // pred_region
          %s322 = sand.u32 %s70, 1
          %s323 = sand.u32 %s70, 1
          %s324 = smul.addr %s323, 32
          %s325 = scalar_lea.vmem [#allocation5], %s324
        $region123: #{layer1_forward.1} parent=118 // pred_fallthru
          _
      $region119: #{layer1_forward.1} parent=5 // pred_fallthru
        _
    $region6: #{layer1_forward.1} parent=1 // loop_footer
      %s13 = sadd.s32 1, %s9
    $region7: #{layer1_forward.1} parent=1 // loop_footer_branch
      %8 = sbr.rel target = $region3
    $region8: #{layer1_forward.1} parent=1 // loop_exit
      _
    %326 = vsyncpa [#allocation4], 1
    %s327 = scalar_lea.sflag [#allocation4], 1
    %328 = vsyncpa %s327, 1

</llo_original>
